<compile_context>
chip_gen: v7x
topology: tpu7x:2x2x1
jax: 0.10.0
libtpu: 0.0.40
codegen_flags: <defaults>
</compile_context>

<pallas_src>
import functools

import jax
import jax.numpy as jnp
from jax.experimental import pallas as pl
from jax.experimental.pallas import tpu as pltpu

LN_EPS = 1e-5


def _round_up(x, m):
    return ((x + m - 1) // m) * m


def _pre_norm_scale_kernel(x_ref, gamma_ref, beta_ref, o_ref, *, inv_d):
    """Fused LayerNorm(last dim) with the learned scale pre-folded into gamma/beta.

    x_ref:     (TR, D) row tile
    gamma_ref: (1, D)  = gamma * scale   (folded in the wrapper)
    beta_ref:  (1, D)  = beta  * scale   (folded in the wrapper)
    o_ref:     (TR, D)
    """
    x = x_ref[...].astype(jnp.float32)                      # single f32 working copy

    # Two independent cross-lane reductions (can interleave on the XLU pipes).
    s1 = jnp.sum(x, axis=-1, keepdims=True)                 # (TR, 1)
    s2 = jnp.sum(x * x, axis=-1, keepdims=True)             # (TR, 1)
    mean = s1 * inv_d
    var = jnp.maximum(s2 * inv_d - mean * mean, 0.0)        # biased variance
    inv_std = jax.lax.rsqrt(var + LN_EPS)                   # EUP slot (free vs DMA)

    gamma = gamma_ref[...].astype(jnp.float32)              # (1, D) -> broadcast
    beta = beta_ref[...].astype(jnp.float32)

    # TODO(synk): `fn` is an arbitrary wrapped module in the PyTorch code; it is
    # the identity here (a concrete attention/MLP fn would be fused at this point,
    # and the scale fold below would then have to stay a separate multiply).
    o_ref[...] = ((x - mean) * inv_std * gamma + beta).astype(o_ref.dtype)


def _pick_tile_rows(total_rows, d, itemsize):
    """Largest row tile (<=1024, multiple of 8) keeping ~16 MiB of tile VMEM."""
    budget = 16 * 1024 * 1024
    # 2 input buffers + 2 output buffers (double-buffered) + one f32 working copy.
    per_row_bytes = d * (4 * itemsize + 4)
    tr = budget // max(per_row_bytes, 1)
    tr = int(max(8, min(1024, tr)))
    tr = (tr // 8) * 8
    if total_rows <= tr:
        return _round_up(total_rows, 8)
    return tr


@jax.jit
def pre_norm_scale(x, gamma, beta, scale):
    """out = LayerNorm(x) * scale  (fn == identity).

    x: (B, N, D); gamma/beta: (D,); scale: (1, 1, D).
    """
    B, N, D = x.shape
    total = B * N
    itemsize = x.dtype.itemsize

    # Fold the learned per-feature scale into the LayerNorm affine params
    # (removes one input DMA stream and one full-tile multiply in the kernel).
    scale_d = scale.reshape(D).astype(jnp.float32)
    gamma_f = (gamma.astype(jnp.float32) * scale_d).reshape(1, D)
    beta_f = (beta.astype(jnp.float32) * scale_d).reshape(1, D)

    # Flatten to a (rows, D) slab and tile over rows so pipelining has many
    # grid steps and VMEM use is independent of N.
    # TODO(synk): for real ViT configs keep D a multiple of 128 for lane-dense
    # stores; the demo D=32 falls back to masked stores.
    x2 = x.reshape(total, D)
    tr = _pick_tile_rows(total, D, itemsize)
    padded = _round_up(total, tr)
    if padded != total:
        x2 = jnp.pad(x2, ((0, padded - total), (0, 0)))
    grid = (padded // tr,)

    cost = pl.CostEstimate(
        flops=int(7 * total * D),
        transcendentals=int(total),
        bytes_accessed=int(2 * total * D * itemsize + 2 * D * 4),
    )

    out = pl.pallas_call(
        functools.partial(_pre_norm_scale_kernel, inv_d=1.0 / D),
        out_shape=jax.ShapeDtypeStruct((padded, D), x.dtype),
        grid_spec=pltpu.PrefetchScalarGridSpec(
            num_scalar_prefetch=0,
            grid=grid,
            in_specs=[
                pl.BlockSpec((tr, D), lambda i: (i, 0)),     # x row tile
                pl.BlockSpec((1, D), lambda i: (0, 0)),      # gamma * scale
                pl.BlockSpec((1, D), lambda i: (0, 0)),      # beta * scale
            ],
            out_specs=pl.BlockSpec((tr, D), lambda i: (i, 0)),
        ),
        compiler_params=pltpu.CompilerParams(
            dimension_semantics=("parallel",),
            vmem_limit_bytes=32 * 1024 * 1024,
        ),
        cost_estimate=cost,
    )(x2, gamma_f, beta_f)

    if padded != total:
        out = out[:total]
    return out.reshape(B, N, D)


def reference(x, gamma, beta, scale):
    x32 = x.astype(jnp.float32)
    mean = jnp.mean(x32, axis=-1, keepdims=True)
    var = jnp.mean((x32 - mean) ** 2, axis=-1, keepdims=True)
    y = (x32 - mean) * jax.lax.rsqrt(var + LN_EPS) * gamma + beta
    return (y * scale).astype(x.dtype)


if __name__ == "__main__":
    # Module hyper-params (small, consistent with the forward pass).
    B, N, D = 2, 8, 32
    depth = 12                      # depth <= 18 -> init_eps = 0.1
    if depth <= 18:
        init_eps = 0.1
    elif depth <= 24:
        init_eps = 1e-5
    else:
        init_eps = 1e-6

    key = jax.random.PRNGKey(0)
    x = jax.random.normal(key, (B, N, D), dtype=jnp.float32)

    # Deterministic parameter init (matches nn.LayerNorm defaults + scale fill).
    gamma = jnp.ones((D,), dtype=jnp.float32)
    beta = jnp.zeros((D,), dtype=jnp.float32)
    scale = jnp.full((1, 1, D), init_eps, dtype=jnp.float32)

    out = jax.block_until_ready(pre_norm_scale(x, gamma, beta, scale))
    ref = reference(x, gamma, beta, scale)

    assert out.shape == (B, N, D)
    assert jnp.allclose(out, ref, atol=2e-5, rtol=1e-4), "mismatch vs reference"

    print("KERNEL_OK")
</pallas_src>

<mosaic_0001>
module attributes {stable_mosaic.version = 11 : i64} {
  func.func @_pre_norm_scale_kernel(%arg0: i32, %arg1: memref<16x32xf32, #tpu.memory_space<vmem>>, %arg2: memref<1x32xf32, #tpu.memory_space<vmem>>, %arg3: memref<1x32xf32, #tpu.memory_space<vmem>>, %arg4: memref<16x32xf32, #tpu.memory_space<vmem>>) attributes {dimension_semantics = [#tpu.dimension_semantics<parallel>], iteration_bounds = array<i64: 1>, scalar_prefetch = 0 : i64, scratch_operands = 0 : i64, tpu.core_type = #tpu.core_type<tc>, window_params = [{transform_indices = @transform_0, window_bounds = array<i64: 16, 32>}, {pipeline_mode = #tpu.pipeline_mode<synchronous>, transform_indices = @transform_1, window_bounds = array<i64: 1, 32>}, {pipeline_mode = #tpu.pipeline_mode<synchronous>, transform_indices = @transform_2, window_bounds = array<i64: 1, 32>}, {transform_indices = @transform_3, window_bounds = array<i64: 16, 32>}]} {
    %c0 = arith.constant 0 : index
    %c0_0 = arith.constant 0 : index
    %0 = vector.load %arg1[%c0, %c0_0] : memref<16x32xf32, #tpu.memory_space<vmem>>, vector<16x32xf32>
    %cst = arith.constant dense<0.000000e+00> : vector<16xf32>
    %1 = vector.multi_reduction <add>, %0, %cst [1] : vector<16x32xf32> to vector<16xf32>
    %2 = vector.shape_cast %1 : vector<16xf32> to vector<16x1xf32>
    %3 = arith.mulf %0, %0 : vector<16x32xf32>
    %cst_1 = arith.constant dense<0.000000e+00> : vector<16xf32>
    %4 = vector.multi_reduction <add>, %3, %cst_1 [1] : vector<16x32xf32> to vector<16xf32>
    %5 = vector.shape_cast %4 : vector<16xf32> to vector<16x1xf32>
    %cst_2 = arith.constant 3.125000e-02 : f32
    %6 = vector.broadcast %cst_2 : f32 to vector<16x1xf32>
    %7 = arith.mulf %2, %6 : vector<16x1xf32>
    %cst_3 = arith.constant 3.125000e-02 : f32
    %8 = vector.broadcast %cst_3 : f32 to vector<16x1xf32>
    %9 = arith.mulf %5, %8 : vector<16x1xf32>
    %10 = arith.mulf %7, %7 : vector<16x1xf32>
    %11 = arith.subf %9, %10 : vector<16x1xf32>
    %cst_4 = arith.constant 0.000000e+00 : f32
    %12 = vector.broadcast %cst_4 : f32 to vector<16x1xf32>
    %13 = arith.maximumf %11, %12 : vector<16x1xf32>
    %cst_5 = arith.constant 9.99999974E-6 : f32
    %14 = vector.broadcast %cst_5 : f32 to vector<16x1xf32>
    %15 = arith.addf %13, %14 : vector<16x1xf32>
    %16 = math.rsqrt %15 : vector<16x1xf32>
    %c0_6 = arith.constant 0 : index
    %c0_7 = arith.constant 0 : index
    %17 = vector.load %arg2[%c0_6, %c0_7] : memref<1x32xf32, #tpu.memory_space<vmem>>, vector<1x32xf32>
    %c0_8 = arith.constant 0 : index
    %c0_9 = arith.constant 0 : index
    %18 = vector.load %arg3[%c0_8, %c0_9] : memref<1x32xf32, #tpu.memory_space<vmem>>, vector<1x32xf32>
    %19 = vector.broadcast %7 : vector<16x1xf32> to vector<16x32xf32>
    %20 = arith.subf %0, %19 : vector<16x32xf32>
    %21 = vector.broadcast %16 : vector<16x1xf32> to vector<16x32xf32>
    %22 = arith.mulf %20, %21 : vector<16x32xf32>
    %23 = vector.broadcast %17 : vector<1x32xf32> to vector<16x32xf32>
    %24 = arith.mulf %22, %23 : vector<16x32xf32>
    %25 = vector.broadcast %18 : vector<1x32xf32> to vector<16x32xf32>
    %26 = arith.addf %24, %25 : vector<16x32xf32>
    %c0_10 = arith.constant 0 : index
    %c0_11 = arith.constant 0 : index
    %27 = vector.load %arg4[%c0_10, %c0_11] : memref<16x32xf32, #tpu.memory_space<vmem>>, vector<16x32xf32>
    tpu.vector_store %arg4[%c0_10, %c0_11], %26 {strides = array<i32>} : memref<16x32xf32, #tpu.memory_space<vmem>>, vector<16x32xf32>,
    return
  }
  func.func @transform_0(%arg0: i32) -> (i32, i32) {
    %c0_i32 = arith.constant 0 : i32
    %c0_i32_0 = arith.constant 0 : i32
    return %arg0, %c0_i32 : i32, i32
  }
  func.func @transform_1(%arg0: i32) -> (i32, i32) {
    %c0_i32 = arith.constant 0 : i32
    %c0_i32_0 = arith.constant 0 : i32
    %c0_i32_1 = arith.constant 0 : i32
    return %c0_i32, %c0_i32_0 : i32, i32
  }
  func.func @transform_2(%arg0: i32) -> (i32, i32) {
    %c0_i32 = arith.constant 0 : i32
    %c0_i32_0 = arith.constant 0 : i32
    %c0_i32_1 = arith.constant 0 : i32
    return %c0_i32, %c0_i32_0 : i32, i32
  }
  func.func @transform_3(%arg0: i32) -> (i32, i32) {
    %c0_i32 = arith.constant 0 : i32
    %c0_i32_0 = arith.constant 0 : i32
    return %arg0, %c0_i32 : i32, i32
  }
}

</mosaic_0001>

<llo_original>
// kernel: pre_norm_scale.1
$region0: #{pre_norm_scale.1}
  #allocation0 [shape = 'u32[]', space=smem, size = 0x4, offset = 0x4, fixed_abs, tag = 'smem constant byte address 0x4 - core index']
  #allocation1 [shape = 'u32[144,128]{1,0:T(1,128)}', space=vmem, size = 0x12000, scoped, tag = 'internal scratch']
  %s0 = inlined_call_operand.vmem [shape: f32[16,32], index: 0, kind: input, shape index: {}]
  %s1 = inlined_call_operand.vmem [shape: f32[1,32], index: 1, kind: input, shape index: {}]
  %s2 = inlined_call_operand.vmem [shape: f32[1,32], index: 2, kind: input, shape index: {}]
  %s3 = inlined_call_operand.hbm [shape: f32[16,32], index: 3, kind: output, shape index: {}]
  %s4 = sld [smem:[#allocation0]]
  $region22: #{pre_norm_scale.1} parent=0
    _
  %s6 = ssub.s32 1, %s4
  %s7 = scalar_select 0, %s6, %s4
  $region1: #{pre_norm_scale.1} parent=0
    #allocation2 [shape = 'u8[8192]{0}', space=vmem, size = 0x2000, scoped, tag = 'output window, operand 0, single buffered']
    #allocation3 [shape = 's32[1]{0}', space=sflag, size = 0x4, scoped, tag = 'scoped memory for pre_norm_scale.1']
    %8 = vsyncpa [#allocation3], 0
    // Predicated region
    $region2: #{pre_norm_scale.1} parent=1 // pred_check
      _
    $region3: #{pre_norm_scale.1} parent=1 // pred_check_branch
      %10 = sbr.rel (0) target = $region5
    $region4: #{pre_norm_scale.1} parent=1 // pred_region
      _
    $region5: #{pre_norm_scale.1} parent=1 // pred_fallthru
      _
    // Predicated region
    $region6: #{pre_norm_scale.1} parent=1 // pred_check
      _
    $region7: #{pre_norm_scale.1} parent=1 // pred_check_branch
      %12 = sbr.rel (0) target = $region9
    $region8: #{pre_norm_scale.1} parent=1 // pred_region
      _
    $region9: #{pre_norm_scale.1} parent=1 // pred_fallthru
      _
    // Predicated region
    $region10: #{pre_norm_scale.1} parent=1 // pred_check
      _
    $region11: #{pre_norm_scale.1} parent=1 // pred_check_branch
      %14 = sbr.rel (0) target = $region13
    $region12: #{pre_norm_scale.1} parent=1 // pred_region
      _
    $region13: #{pre_norm_scale.1} parent=1 // pred_fallthru
      _
    %v15 = vld [vmem:[%s0] sm:$0xff]
    %v16 = vld [vmem:[%s0 + $0x8] sm:$0xff]
    %vm17 = vcmask 261120
    %v18 = vsel %vm17, %v15, 0.0
    %19 = vadd.xlane.f32.xlu0 %v18
    %v20 = vpop.xlane.xlu0 %19
    %v21 = vsel %vm17, %v16, 0.0
    %22 = vadd.xlane.f32.xlu0 %v21
    %v23 = vpop.xlane.xlu0 %22
    %v24 = vmul.f32 %v15, %v15
    %v25 = vmul.f32 %v16, %v16
    %v26 = vsel %vm17, %v24, 0.0
    %27 = vadd.xlane.f32.xlu0 %v26
    %v28 = vpop.xlane.xlu0 %27
    %v29 = vsel %vm17, %v25, 0.0
    %30 = vadd.xlane.f32.xlu0 %v29
    %v31 = vpop.xlane.xlu0 %30
    %v32 = vmul.f32 %v20, 0.03125
    %v33 = vmul.f32 %v23, 0.03125
    %v34 = vmul.f32 %v28, 0.03125
    %v35 = vmul.f32 %v31, 0.03125
    %v36 = vmul.f32 %v32, %v32
    %v37 = vmul.f32 %v33, %v33
    %v38 = vsub.f32 %v34, %v36
    %v39 = vsub.f32 %v35, %v37
    %v40 = vmax.f32 %v38, 0.0
    %v41 = vmax.f32 %v39, 0.0
    %v42 = vadd.f32 %v40, 1e-05
    %v43 = vadd.f32 %v41, 1e-05
    %v44 = vrsqrt.pop %v42
    %v45 = vrsqrt.pop %v43
    %v46 = vld [vmem:[%s1] sm:$0x1]
    %v47 = vld [vmem:[%s2] sm:$0x1]
    %v48 = vsub.f32 %v15, %v32
    %v49 = vsub.f32 %v16, %v33
    %v50 = vmul.f32 %v48, %v44
    %v51 = vmul.f32 %v49, %v45
    %v53 = vlaneseq
    %v54 = vshrl.u32 %v53, 7
    %v55 = vsub.s32 0, %v54
    %v56 = vrot.slane %v46, %v55
    %v58 = vmul.f32 %v50, %v56
    %v59 = vmul.f32 %v51, %v56
    %v61 = vlaneseq
    %v62 = vshrl.u32 %v61, 7
    %v63 = vsub.s32 0, %v62
    %v64 = vrot.slane %v47, %v63
    %v66 = vadd.f32 %v58, %v64
    %v67 = vadd.f32 %v59, %v64
    %68 = vst.msk [vmem:[#allocation2] sm:$0xff] %vm17, %v66
    %69 = vst.msk [vmem:[#allocation2 + $0x8] sm:$0xff] %vm17, %v67
    // Predicated region
    $region14: #{pre_norm_scale.1} parent=1 // pred_check
      _
    $region15: #{pre_norm_scale.1} parent=1 // pred_check_branch
      %71 = sbr.rel (0) target = $region17
    $region16: #{pre_norm_scale.1} parent=1 // pred_region
      %s73 = ssub.s32 256, 256
      %74 = vsyncadd [#allocation3], %s73
      %s75 = sshll.u32 [#allocation2], 4
      %s76 = int_to_ptr.vmem [resolvable:$true] %s75
      %81 = dma.vmem_to_hbm [thread:$0]  %s76, 256, %s3, [#allocation3], 128, 128, 8
    $region17: #{pre_norm_scale.1} parent=1 // pred_fallthru
      _
    // Predicated region
    $region18: #{pre_norm_scale.1} parent=1 // pred_check
      _
    $region19: #{pre_norm_scale.1} parent=1 // pred_check_branch
      %83 = sbr.rel (0) target = $region21
    $region20: #{pre_norm_scale.1} parent=1 // pred_region
      %84 = dma.done [#allocation3], 256
    $region21: #{pre_norm_scale.1} parent=1 // pred_fallthru
      _
    %85 = vsyncpa [#allocation3], 1

</llo_original>
